<compile_context>
chip_gen: v6e
topology: v6e:2x2x1
jax: 0.10.0
libtpu: 0.0.40
codegen_flags: <defaults>
</compile_context>

<pallas_src>
import functools

import jax
import jax.numpy as jnp
from jax.experimental import pallas as pl
from jax.experimental.pallas import tpu as pltpu


def _round_up(x: int, m: int) -> int:
    return ((x + m - 1) // m) * m


def ffn_kernel(x_ref, w1_ref, b1_ref, w2_ref, b2_ref, o_ref, acc_ref):
    # Grid = (M tiles, hidden tiles); hidden is the (innermost) reduction axis.
    j = pl.program_id(1)

    @pl.when(j == 0)
    def _():
        acc_ref[...] = jnp.zeros_like(acc_ref)

    # First linear (bf16 operands, f32 accumulation) + bias + ReLU.
    h = jnp.dot(x_ref[...], w1_ref[...], preferred_element_type=jnp.float32)
    h = jnp.maximum(h + b1_ref[...], 0.0)

    # Second linear: accumulate this hidden chunk's contribution in f32.
    acc_ref[...] += jnp.dot(h.astype(w2_ref.dtype), w2_ref[...],
                            preferred_element_type=jnp.float32)

    @pl.when(j == pl.num_programs(1) - 1)
    def _():
        # TODO(synk): dropout (training-mode RNG masking) intentionally
        # omitted — forward semantics match eval mode (identity).
        o_ref[...] = (acc_ref[...] + b2_ref[...]).astype(o_ref.dtype)


@functools.partial(jax.jit, static_argnames=("tm", "th"))
def _feed_forward_impl(x2d, w1, b1, w2, b2, *, tm, th):
    M, n_embd = x2d.shape
    hidden = w1.shape[1]
    out_dtype = x2d.dtype

    # Lane-dense padding: feature dims up to multiples of 128.
    n_p = _round_up(n_embd, 128)

    # Tile sizes adapted to the problem size.
    tm = min(tm, _round_up(M, 8))            # sublane-aligned M tile
    th = min(th, _round_up(hidden, 128))     # hidden tile (multiple of 128)
    h_p = _round_up(_round_up(hidden, 128), th)
    m_p = _round_up(M, tm)

    # Pad & cast MXU operands to bf16 (zeros in padding contribute nothing:
    # padded W2 rows are zero, so padded hidden columns are inert).
    xb = jnp.zeros((m_p, n_p), jnp.bfloat16).at[:M, :n_embd].set(
        x2d.astype(jnp.bfloat16))
    w1b = jnp.zeros((n_p, h_p), jnp.bfloat16).at[:n_embd, :hidden].set(
        w1.astype(jnp.bfloat16))
    w2b = jnp.zeros((h_p, n_p), jnp.bfloat16).at[:hidden, :n_embd].set(
        w2.astype(jnp.bfloat16))
    b1p = jnp.zeros((1, h_p), jnp.float32).at[0, :hidden].set(
        b1.astype(jnp.float32))
    b2p = jnp.zeros((1, n_p), jnp.float32).at[0, :n_embd].set(
        b2.astype(jnp.float32))

    grid = (m_p // tm, h_p // th)

    cost = pl.CostEstimate(
        flops=2 * M * n_embd * hidden * 2,   # two matmuls
        transcendentals=0,
        bytes_accessed=(xb.size * 2 + w1b.size * 2 + w2b.size * 2
                        + b1p.size * 4 + b2p.size * 4
                        + m_p * n_p * jnp.dtype(out_dtype).itemsize),
    )

    out = pl.pallas_call(
        ffn_kernel,
        out_shape=jax.ShapeDtypeStruct((m_p, n_p), out_dtype),
        grid_spec=pltpu.PrefetchScalarGridSpec(
            num_scalar_prefetch=0,
            grid=grid,
            in_specs=[
                pl.BlockSpec((tm, n_p), lambda i, j: (i, 0)),   # x tile
                pl.BlockSpec((n_p, th), lambda i, j: (0, j)),   # W1 hidden-tile
                pl.BlockSpec((1, th), lambda i, j: (0, j)),     # b1 hidden-tile
                pl.BlockSpec((th, n_p), lambda i, j: (j, 0)),   # W2 hidden-tile
                pl.BlockSpec((1, n_p), lambda i, j: (0, 0)),    # b2
            ],
            out_specs=pl.BlockSpec((tm, n_p), lambda i, j: (i, 0)),
            scratch_shapes=[pltpu.VMEM((tm, n_p), jnp.float32)],
        ),
        compiler_params=pltpu.CompilerParams(
            dimension_semantics=("parallel", "arbitrary"),
            vmem_limit_bytes=64 * 1024 * 1024,
        ),
        cost_estimate=cost,
    )(xb, w1b, b1p, w2b, b2p)

    return out[:M, :n_embd]


def feed_forward(x2d, w1, b1, w2, b2, *, tm=256, th=512):
    """x2d: [M, n_embd]; w1: [n_embd, 4n]; b1: [4n]; w2: [4n, n_embd]; b2: [n_embd]."""
    return _feed_forward_impl(x2d, w1, b1, w2, b2, tm=tm, th=th)


def _init_linear(key, fan_in, fan_out, dtype=jnp.float32):
    """PyTorch nn.Linear default init: U(-1/sqrt(fan_in), 1/sqrt(fan_in)).

    Returns W already transposed to [fan_in, fan_out] for x @ W."""
    kw, kb = jax.random.split(key)
    bound = 1.0 / jnp.sqrt(fan_in)
    w = jax.random.uniform(kw, (fan_in, fan_out), dtype, -bound, bound)
    b = jax.random.uniform(kb, (fan_out,), dtype, -bound, bound)
    return w, b


if __name__ == "__main__":
    # Small shapes implied by the module: batch=2, seq=8, n_embd=32.
    batch, seq, n_embd = 2, 8, 32
    hidden = 4 * n_embd  # 128

    key = jax.random.PRNGKey(0)
    kx, k1, k2 = jax.random.split(key, 3)

    x = jax.random.normal(kx, (batch, seq, n_embd), jnp.float32)
    w1, b1 = _init_linear(k1, n_embd, hidden)
    w2, b2 = _init_linear(k2, hidden, n_embd)

    # Flatten (batch, seq) -> M rows; feature dim stays last.
    x2d = x.reshape(batch * seq, n_embd)
    out2d = feed_forward(x2d, w1, b1, w2, b2)
    out = out2d.reshape(batch, seq, n_embd)
    jax.block_until_ready(out)

    # Reference mimicking the kernel's bf16 operand / f32 accumulation path.
    xf = x2d.astype(jnp.bfloat16).astype(jnp.float32)
    w1f = w1.astype(jnp.bfloat16).astype(jnp.float32)
    w2f = w2.astype(jnp.bfloat16).astype(jnp.float32)
    h_ref = jnp.maximum(xf @ w1f + b1, 0.0)
    ref2d = h_ref.astype(jnp.bfloat16).astype(jnp.float32) @ w2f + b2
    ref = ref2d.reshape(batch, seq, n_embd)
    assert jnp.allclose(out, ref, atol=1e-2, rtol=1e-2), "mismatch vs reference"

    print("KERNEL_OK")
</pallas_src>

<mosaic_0001>
module attributes {stable_mosaic.version = 11 : i64} {
  func.func @ffn_kernel(%arg0: i32, %arg1: i32, %arg2: memref<16x128xbf16, #tpu.memory_space<vmem>>, %arg3: memref<128x128xbf16, #tpu.memory_space<vmem>>, %arg4: memref<1x128xf32, #tpu.memory_space<vmem>>, %arg5: memref<128x128xbf16, #tpu.memory_space<vmem>>, %arg6: memref<1x128xf32, #tpu.memory_space<vmem>>, %arg7: memref<16x128xf32, #tpu.memory_space<vmem>>, %arg8: memref<16x128xf32, #tpu.memory_space<vmem>>) attributes {dimension_semantics = [#tpu.dimension_semantics<parallel>, #tpu.dimension_semantics<arbitrary>], iteration_bounds = array<i64: 1, 1>, scalar_prefetch = 0 : i64, scratch_operands = 1 : i64, tpu.core_type = #tpu.core_type<tc>, window_params = [{transform_indices = @transform_0, window_bounds = array<i64: 16, 128>}, {transform_indices = @transform_1, window_bounds = array<i64: 128, 128>}, {transform_indices = @transform_2, window_bounds = array<i64: 1, 128>}, {transform_indices = @transform_3, window_bounds = array<i64: 128, 128>}, {pipeline_mode = #tpu.pipeline_mode<synchronous>, transform_indices = @transform_4, window_bounds = array<i64: 1, 128>}, {transform_indices = @transform_5, window_bounds = array<i64: 16, 128>}]} {
    %c0_i32 = arith.constant 0 : i32
    %0 = arith.cmpi eq, %arg1, %c0_i32 : i32
    %1 = arith.extui %0 : i1 to i32
    %c0_i32_0 = arith.constant 0 : i32
    %2 = arith.cmpi ne, %1, %c0_i32_0 : i32
    scf.if %2 {
      %cst_16 = arith.constant 0.000000e+00 : f32
      %20 = vector.broadcast %cst_16 : f32 to vector<16x128xf32>
      %c0_17 = arith.constant 0 : index
      %c0_18 = arith.constant 0 : index
      %21 = vector.load %arg8[%c0_17, %c0_18] : memref<16x128xf32, #tpu.memory_space<vmem>>, vector<16x128xf32>
      tpu.vector_store %arg8[%c0_17, %c0_18], %20 {strides = array<i32>} : memref<16x128xf32, #tpu.memory_space<vmem>>, vector<16x128xf32>,
    } else {
    }
    %c0 = arith.constant 0 : index
    %c0_1 = arith.constant 0 : index
    %3 = vector.load %arg2[%c0, %c0_1] : memref<16x128xbf16, #tpu.memory_space<vmem>>, vector<16x128xbf16>
    %c0_2 = arith.constant 0 : index
    %c0_3 = arith.constant 0 : index
    %4 = vector.load %arg3[%c0_2, %c0_3] : memref<128x128xbf16, #tpu.memory_space<vmem>>, vector<128x128xbf16>
    %cst = arith.constant dense<0.000000e+00> : vector<16x128xf32>
    %5 = tpu.matmul %3, %4, %cst {dimension_numbers = #tpu.dot_dimension_numbers<[1], [0], [0], [1], [0, 0, 1, 1], [], []>} : vector<16x128xbf16>, vector<128x128xbf16>, vector<16x128xf32> -> vector<16x128xf32>
    %c0_4 = arith.constant 0 : index
    %c0_5 = arith.constant 0 : index
    %6 = vector.load %arg4[%c0_4, %c0_5] : memref<1x128xf32, #tpu.memory_space<vmem>>, vector<1x128xf32>
    %7 = vector.broadcast %6 : vector<1x128xf32> to vector<16x128xf32>
    %8 = arith.addf %5, %7 : vector<16x128xf32>
    %cst_6 = arith.constant 0.000000e+00 : f32
    %9 = vector.broadcast %cst_6 : f32 to vector<16x128xf32>
    %10 = arith.maximumf %8, %9 : vector<16x128xf32>
    %c0_7 = arith.constant 0 : index
    %c0_8 = arith.constant 0 : index
    %11 = vector.load %arg8[%c0_7, %c0_8] : memref<16x128xf32, #tpu.memory_space<vmem>>, vector<16x128xf32>
    %12 = arith.truncf %10 : vector<16x128xf32> to vector<16x128xbf16>
    %c0_9 = arith.constant 0 : index
    %c0_10 = arith.constant 0 : index
    %13 = vector.load %arg5[%c0_9, %c0_10] : memref<128x128xbf16, #tpu.memory_space<vmem>>, vector<128x128xbf16>
    %cst_11 = arith.constant dense<0.000000e+00> : vector<16x128xf32>
    %14 = tpu.matmul %12, %13, %cst_11 {dimension_numbers = #tpu.dot_dimension_numbers<[1], [0], [0], [1], [0, 0, 1, 1], [], []>} : vector<16x128xbf16>, vector<128x128xbf16>, vector<16x128xf32> -> vector<16x128xf32>
    %15 = arith.addf %11, %14 : vector<16x128xf32>
    %c0_12 = arith.constant 0 : index
    %c0_13 = arith.constant 0 : index
    %16 = vector.load %arg8[%c0_12, %c0_13] : memref<16x128xf32, #tpu.memory_space<vmem>>, vector<16x128xf32>
    tpu.vector_store %arg8[%c0_12, %c0_13], %15 {strides = array<i32>} : memref<16x128xf32, #tpu.memory_space<vmem>>, vector<16x128xf32>,
    %c0_i32_14 = arith.constant 0 : i32
    %17 = arith.cmpi eq, %arg1, %c0_i32_14 : i32
    %18 = arith.extui %17 : i1 to i32
    %c0_i32_15 = arith.constant 0 : i32
    %19 = arith.cmpi ne, %18, %c0_i32_15 : i32
    scf.if %19 {
      %c0_16 = arith.constant 0 : index
      %c0_17 = arith.constant 0 : index
      %20 = vector.load %arg8[%c0_16, %c0_17] : memref<16x128xf32, #tpu.memory_space<vmem>>, vector<16x128xf32>
      %c0_18 = arith.constant 0 : index
      %c0_19 = arith.constant 0 : index
      %21 = vector.load %arg6[%c0_18, %c0_19] : memref<1x128xf32, #tpu.memory_space<vmem>>, vector<1x128xf32>
      %22 = vector.broadcast %21 : vector<1x128xf32> to vector<16x128xf32>
      %23 = arith.addf %20, %22 : vector<16x128xf32>
      %c0_20 = arith.constant 0 : index
      %c0_21 = arith.constant 0 : index
      %24 = vector.load %arg7[%c0_20, %c0_21] : memref<16x128xf32, #tpu.memory_space<vmem>>, vector<16x128xf32>
      tpu.vector_store %arg7[%c0_20, %c0_21], %23 {strides = array<i32>} : memref<16x128xf32, #tpu.memory_space<vmem>>, vector<16x128xf32>,
    } else {
    }
    return
  }
  func.func @transform_0(%arg0: i32, %arg1: i32) -> (i32, i32) {
    %c0_i32 = arith.constant 0 : i32
    %c0_i32_0 = arith.constant 0 : i32
    return %arg0, %c0_i32 : i32, i32
  }
  func.func @transform_1(%arg0: i32, %arg1: i32) -> (i32, i32) {
    %c0_i32 = arith.constant 0 : i32
    %c0_i32_0 = arith.constant 0 : i32
    return %c0_i32, %arg1 : i32, i32
  }
  func.func @transform_2(%arg0: i32, %arg1: i32) -> (i32, i32) {
    %c0_i32 = arith.constant 0 : i32
    %c0_i32_0 = arith.constant 0 : i32
    return %c0_i32, %arg1 : i32, i32
  }
  func.func @transform_3(%arg0: i32, %arg1: i32) -> (i32, i32) {
    %c0_i32 = arith.constant 0 : i32
    %c0_i32_0 = arith.constant 0 : i32
    return %arg1, %c0_i32 : i32, i32
  }
  func.func @transform_4(%arg0: i32, %arg1: i32) -> (i32, i32) {
    %c0_i32 = arith.constant 0 : i32
    %c0_i32_0 = arith.constant 0 : i32
    %c0_i32_1 = arith.constant 0 : i32
    return %c0_i32, %c0_i32_0 : i32, i32
  }
  func.func @transform_5(%arg0: i32, %arg1: i32) -> (i32, i32) {
    %c0_i32 = arith.constant 0 : i32
    %c0_i32_0 = arith.constant 0 : i32
    return %arg0, %c0_i32 : i32, i32
  }
}

</mosaic_0001>

<llo_original>
// kernel: _feed_forward_impl.1
$region0: #{_feed_forward_impl.1}
  #allocation0 [shape = 'u32[]', space=smem, size = 0x4, offset = 0x4, fixed_abs, tag = 'smem constant byte address 0x4 - core index']
  #allocation1 [shape = 'u32[144,128]{1,0:T(1,128)}', space=vmem, size = 0x12000, scoped, tag = 'internal scratch']
  #allocation2 [shape = 'f32[16,128]{1,0:T(8,128)}', space=vmem, size = 0x2000, scoped, tag = 'scratch operand']
  %s0 = inlined_call_operand.vmem [shape: bf16[16,128], index: 0, kind: input, shape index: {}]
  %s1 = inlined_call_operand.vmem [shape: bf16[128,128], index: 1, kind: input, shape index: {}]
  %s2 = inlined_call_operand.vmem [shape: f32[1,128], index: 2, kind: input, shape index: {}]
  %s3 = inlined_call_operand.vmem [shape: bf16[128,128], index: 3, kind: input, shape index: {}]
  %s4 = inlined_call_operand.vmem [shape: f32[1,128], index: 4, kind: input, shape index: {}]
  %s5 = inlined_call_operand.hbm [shape: f32[16,128], index: 5, kind: output, shape index: {}]
  %s6 = sld [smem:[#allocation0]]
  $region38: #{_feed_forward_impl.1} parent=0
    _
  %s8 = ssub.s32 1, %s6
  %s9 = scalar_select 0, %s8, %s6
  $region1: #{_feed_forward_impl.1} parent=0
    #allocation3 [shape = 'u8[8192]{0}', space=vmem, size = 0x2000, scoped, tag = 'output window, operand 0, single buffered']
    #allocation4 [shape = 's32[1]{0}', space=sflag, size = 0x4, scoped, tag = 'scoped memory for _feed_forward_impl.1']
    %10 = vsyncpa [#allocation4], 0
    // Predicated region
    $region2: #{_feed_forward_impl.1} parent=1 // pred_check
      _
    $region3: #{_feed_forward_impl.1} parent=1 // pred_check_branch
      %12 = sbr.rel (0) target = $region5
    $region4: #{_feed_forward_impl.1} parent=1 // pred_region
      _
    $region5: #{_feed_forward_impl.1} parent=1 // pred_fallthru
      _
    // Predicated region
    $region6: #{_feed_forward_impl.1} parent=1 // pred_check
      _
    $region7: #{_feed_forward_impl.1} parent=1 // pred_check_branch
      %14 = sbr.rel (0) target = $region9
    $region8: #{_feed_forward_impl.1} parent=1 // pred_region
      _
    $region9: #{_feed_forward_impl.1} parent=1 // pred_fallthru
      _
    // Predicated region
    $region10: #{_feed_forward_impl.1} parent=1 // pred_check
      _
    $region11: #{_feed_forward_impl.1} parent=1 // pred_check_branch
      %16 = sbr.rel (0) target = $region13
    $region12: #{_feed_forward_impl.1} parent=1 // pred_region
      _
    $region13: #{_feed_forward_impl.1} parent=1 // pred_fallthru
      _
    // Predicated region
    $region14: #{_feed_forward_impl.1} parent=1 // pred_check
      _
    $region15: #{_feed_forward_impl.1} parent=1 // pred_check_branch
      %18 = sbr.rel (0) target = $region17
    $region16: #{_feed_forward_impl.1} parent=1 // pred_region
      _
    $region17: #{_feed_forward_impl.1} parent=1 // pred_fallthru
      _
    // Predicated region
    $region18: #{_feed_forward_impl.1} parent=1 // pred_check
      _
    $region19: #{_feed_forward_impl.1} parent=1 // pred_check_branch
      %20 = sbr.rel (0) target = $region21
    $region20: #{_feed_forward_impl.1} parent=1 // pred_region
      _
    $region21: #{_feed_forward_impl.1} parent=1 // pred_fallthru
      _
    %p22 = scmp.eq.s32.totalorder 0, 0
    // Predicated region
    $region22: #{_feed_forward_impl.1} parent=1 // pred_check
      %p23 = pneg %p22
    $region23: #{_feed_forward_impl.1} parent=1 // pred_check_branch
      %25 = sbr.rel (%p23) target = $region25
    $region24: #{_feed_forward_impl.1} parent=1 // pred_region
      %26 = vst [vmem:[#allocation2] sm:$0xff] 0.0
      %27 = vst [vmem:[#allocation2 + $0x8] sm:$0xff] 0.0
    $region25: #{_feed_forward_impl.1} parent=1 // pred_fallthru
      _
    %v28 = vld [vmem:[%s0] sm:$0xf]
    %v29 = vld [vmem:[%s0 + $0x4] sm:$0xf]
    %v30 = vld [vmem:[%s1] sm:$0xf]
    %v31 = vld [vmem:[%s1 + $0x4] sm:$0xf]
    %v32 = vld [vmem:[%s1 + $0x8] sm:$0xf]
    %v33 = vld [vmem:[%s1 + $0xc] sm:$0xf]
    %v34 = vld [vmem:[%s1 + $0x10] sm:$0xf]
    %v35 = vld [vmem:[%s1 + $0x14] sm:$0xf]
    %v36 = vld [vmem:[%s1 + $0x18] sm:$0xf]
    %v37 = vld [vmem:[%s1 + $0x1c] sm:$0xf]
    %v38 = vld [vmem:[%s1 + $0x20] sm:$0xf]
    %v39 = vld [vmem:[%s1 + $0x24] sm:$0xf]
    %v40 = vld [vmem:[%s1 + $0x28] sm:$0xf]
    %v41 = vld [vmem:[%s1 + $0x2c] sm:$0xf]
    %v42 = vld [vmem:[%s1 + $0x30] sm:$0xf]
    %v43 = vld [vmem:[%s1 + $0x34] sm:$0xf]
    %v44 = vld [vmem:[%s1 + $0x38] sm:$0xf]
    %v45 = vld [vmem:[%s1 + $0x3c] sm:$0xf]
    %v46 = vld [vmem:[%s2] sm:$0x1]
    %v48 = vlaneseq
    %v49 = vshrl.u32 %v48, 7
    %v50 = vsub.s32 0, %v49
    %v51 = vrot.slane %v46, %v50
    %v55 = vunpack.c.l.b16 %v28
    %v56 = vunpack.c.l.b16 %v29
    %v57 = vpack.c.b16 %v56, %v55
    %v75 = vunpack.c.l.b16 %v30
    %v76 = vunpack.c.l.b16 %v31
    %v77 = vunpack.c.l.b16 %v32
    %v78 = vunpack.c.l.b16 %v33
    %v79 = vunpack.c.l.b16 %v34
    %v80 = vunpack.c.l.b16 %v35
    %v81 = vunpack.c.l.b16 %v36
    %v82 = vunpack.c.l.b16 %v37
    %v83 = vunpack.c.l.b16 %v38
    %v84 = vunpack.c.l.b16 %v39
    %v85 = vunpack.c.l.b16 %v40
    %v86 = vunpack.c.l.b16 %v41
    %v87 = vunpack.c.l.b16 %v42
    %v88 = vunpack.c.l.b16 %v43
    %v89 = vunpack.c.l.b16 %v44
    %v90 = vunpack.c.l.b16 %v45
    %v91 = vpack.c.b16 %v76, %v75
    %v92 = vpack.c.b16 %v78, %v77
    %v93 = vpack.c.b16 %v80, %v79
    %v94 = vpack.c.b16 %v82, %v81
    %v95 = vpack.c.b16 %v84, %v83
    %v96 = vpack.c.b16 %v86, %v85
    %v97 = vpack.c.b16 %v88, %v87
    %v98 = vpack.c.b16 %v90, %v89
    %107 = vmatprep.subr.bf16.mxu0 0
    %108 = vmatpush1.bf16.msra.mxu0 %v98
    %109 = vmatprep.subr.bf16.mxu0 0
    %110 = vmatpush1.bf16.msra.mxu0 %v97
    %111 = vmatprep.subr.bf16.mxu0 0
    %112 = vmatpush1.bf16.msra.mxu0 %v96
    %113 = vmatprep.subr.bf16.mxu0 0
    %114 = vmatpush1.bf16.msra.mxu0 %v95
    %115 = vmatprep.subr.bf16.mxu0 0
    %116 = vmatpush1.bf16.msra.mxu0 %v94
    %117 = vmatprep.subr.bf16.mxu0 0
    %118 = vmatpush1.bf16.msra.mxu0 %v93
    %119 = vmatprep.subr.bf16.mxu0 0
    %120 = vmatpush1.bf16.msra.mxu0 %v92
    %121 = vmatprep.subr.bf16.mxu0 0
    %122 = vmatpush1.bf16.msra.mxu0 %v91
    %123 = vmatprep.subr.bf16.mxu0 0
    %124 = vmatpush2.bf16.msra.mxu0 0
    %125 = vmatprep.subr.bf16.mxu0 0
    %126 = vmatpush2.bf16.msra.mxu0 0
    %127 = vmatprep.subr.bf16.mxu0 0
    %128 = vmatpush2.bf16.msra.mxu0 0
    %129 = vmatprep.subr.bf16.mxu0 0
    %130 = vmatpush2.bf16.msra.mxu0 0
    %131 = vmatprep.subr.bf16.mxu0 0
    %132 = vmatpush2.bf16.msra.mxu0 0
    %133 = vmatprep.subr.bf16.mxu0 0
    %134 = vmatpush2.bf16.msra.mxu0 0
    %135 = vmatprep.subr.bf16.mxu0 0
    %136 = vmatpush2.bf16.msra.mxu0 0
    %137 = vmatprep.subr.bf16.mxu0 0
    %138 = vmatpush2.bf16.msra.mxu0 0
    %139 = vmatprep.mubr.bf16.mxu0 0
    %140 = vmatmul.mubr.bf16.gmra.mxu0 %v57
    %v141 = vpop.f32.mrf.mxu0
    %v142 = vadd.f32 %v51, %v141
    %v143 = vpop.f32.mrf.mxu0
    %v144 = vpop.f32.mrf.mxu0
    %v145 = vadd.f32 %v51, %v144
    %v146 = vpop.f32.mrf.mxu0
    %147 = vdwg.mxu0
    %v148 = vmax.f32 %v142, 0.0
    %v149 = vmax.f32 %v145, 0.0
    %v150 = vld [vmem:[#allocation2] sm:$0xff]
    %v151 = vld [vmem:[#allocation2 + $0x8] sm:$0xff]
    %v152 = vpack.c.bf16 %v149, %v148
    %v153 = vld [vmem:[%s3] sm:$0xf]
    %v154 = vld [vmem:[%s3 + $0x4] sm:$0xf]
    %v155 = vld [vmem:[%s3 + $0x8] sm:$0xf]
    %v156 = vld [vmem:[%s3 + $0xc] sm:$0xf]
    %v157 = vld [vmem:[%s3 + $0x10] sm:$0xf]
    %v158 = vld [vmem:[%s3 + $0x14] sm:$0xf]
    %v159 = vld [vmem:[%s3 + $0x18] sm:$0xf]
    %v160 = vld [vmem:[%s3 + $0x1c] sm:$0xf]
    %v161 = vld [vmem:[%s3 + $0x20] sm:$0xf]
    %v162 = vld [vmem:[%s3 + $0x24] sm:$0xf]
    %v163 = vld [vmem:[%s3 + $0x28] sm:$0xf]
    %v164 = vld [vmem:[%s3 + $0x2c] sm:$0xf]
    %v165 = vld [vmem:[%s3 + $0x30] sm:$0xf]
    %v166 = vld [vmem:[%s3 + $0x34] sm:$0xf]
    %v167 = vld [vmem:[%s3 + $0x38] sm:$0xf]
    %v168 = vld [vmem:[%s3 + $0x3c] sm:$0xf]
    %v185 = vunpack.c.l.b16 %v153
    %v186 = vunpack.c.l.b16 %v154
    %v187 = vunpack.c.l.b16 %v155
    %v188 = vunpack.c.l.b16 %v156
    %v189 = vunpack.c.l.b16 %v157
    %v190 = vunpack.c.l.b16 %v158
    %v191 = vunpack.c.l.b16 %v159
    %v192 = vunpack.c.l.b16 %v160
    %v193 = vunpack.c.l.b16 %v161
    %v194 = vunpack.c.l.b16 %v162
    %v195 = vunpack.c.l.b16 %v163
    %v196 = vunpack.c.l.b16 %v164
    %v197 = vunpack.c.l.b16 %v165
    %v198 = vunpack.c.l.b16 %v166
    %v199 = vunpack.c.l.b16 %v167
    %v200 = vunpack.c.l.b16 %v168
    %v201 = vpack.c.b16 %v186, %v185
    %v202 = vpack.c.b16 %v188, %v187
    %v203 = vpack.c.b16 %v190, %v189
    %v204 = vpack.c.b16 %v192, %v191
    %v205 = vpack.c.b16 %v194, %v193
    %v206 = vpack.c.b16 %v196, %v195
    %v207 = vpack.c.b16 %v198, %v197
    %v208 = vpack.c.b16 %v200, %v199
    %217 = vmatprep.subr.bf16.mxu0 0
    %218 = vmatpush1.bf16.msra.mxu0 %v208
    %219 = vmatprep.subr.bf16.mxu0 0
    %220 = vmatpush1.bf16.msra.mxu0 %v207
    %221 = vmatprep.subr.bf16.mxu0 0
    %222 = vmatpush1.bf16.msra.mxu0 %v206
    %223 = vmatprep.subr.bf16.mxu0 0
    %224 = vmatpush1.bf16.msra.mxu0 %v205
    %225 = vmatprep.subr.bf16.mxu0 0
    %226 = vmatpush1.bf16.msra.mxu0 %v204
    %227 = vmatprep.subr.bf16.mxu0 0
    %228 = vmatpush1.bf16.msra.mxu0 %v203
    %229 = vmatprep.subr.bf16.mxu0 0
    %230 = vmatpush1.bf16.msra.mxu0 %v202
    %231 = vmatprep.subr.bf16.mxu0 0
    %232 = vmatpush1.bf16.msra.mxu0 %v201
    %233 = vmatprep.subr.bf16.mxu0 0
    %234 = vmatpush2.bf16.msra.mxu0 0
    %235 = vmatprep.subr.bf16.mxu0 0
    %236 = vmatpush2.bf16.msra.mxu0 0
    %237 = vmatprep.subr.bf16.mxu0 0
    %238 = vmatpush2.bf16.msra.mxu0 0
    %239 = vmatprep.subr.bf16.mxu0 0
    %240 = vmatpush2.bf16.msra.mxu0 0
    %241 = vmatprep.subr.bf16.mxu0 0
    %242 = vmatpush2.bf16.msra.mxu0 0
    %243 = vmatprep.subr.bf16.mxu0 0
    %244 = vmatpush2.bf16.msra.mxu0 0
    %245 = vmatprep.subr.bf16.mxu0 0
    %246 = vmatpush2.bf16.msra.mxu0 0
    %247 = vmatprep.subr.bf16.mxu0 0
    %248 = vmatpush2.bf16.msra.mxu0 0
    %249 = vmatprep.mubr.bf16.mxu0 0
    %250 = vmatmul.mubr.bf16.gmra.mxu0 %v152
    %v251 = vpop.f32.mrf.mxu0
    %v252 = vadd.f32 0.0, %v251
    %v253 = vpop.f32.mrf.mxu0
    %v254 = vpop.f32.mrf.mxu0
    %v255 = vadd.f32 0.0, %v254
    %v256 = vpop.f32.mrf.mxu0
    %257 = vdwg.mxu0
    %v258 = vadd.f32 %v150, %v252
    %v259 = vadd.f32 %v151, %v255
    %260 = vst [vmem:[#allocation2] sm:$0xff] %v258
    %261 = vst [vmem:[#allocation2 + $0x8] sm:$0xff] %v259
    // Predicated region
    $region26: #{_feed_forward_impl.1} parent=1 // pred_check
      %p262 = pneg %p22
    $region27: #{_feed_forward_impl.1} parent=1 // pred_check_branch
      %264 = sbr.rel (%p262) target = $region29
    $region28: #{_feed_forward_impl.1} parent=1 // pred_region
      %v265 = vld [vmem:[#allocation2] sm:$0xff]
      %v266 = vld [vmem:[#allocation2 + $0x8] sm:$0xff]
      %v267 = vld [vmem:[%s4] sm:$0x1]
      %v269 = vlaneseq
      %v270 = vshrl.u32 %v269, 7
      %v271 = vsub.s32 0, %v270
      %v272 = vrot.slane %v267, %v271
      %v274 = vadd.f32 %v265, %v272
      %v275 = vadd.f32 %v266, %v272
      %276 = vst [vmem:[#allocation3] sm:$0xff] %v274
      %277 = vst [vmem:[#allocation3 + $0x8] sm:$0xff] %v275
    $region29: #{_feed_forward_impl.1} parent=1 // pred_fallthru
      _
    // Predicated region
    $region30: #{_feed_forward_impl.1} parent=1 // pred_check
      _
    $region31: #{_feed_forward_impl.1} parent=1 // pred_check_branch
      %279 = sbr.rel (0) target = $region33
    $region32: #{_feed_forward_impl.1} parent=1 // pred_region
      %s281 = ssub.s32 256, 256
      %282 = vsyncadd [#allocation4], %s281
      %s283 = sshll.u32 [#allocation3], 4
      %s284 = int_to_ptr.vmem [resolvable:$true] %s283
      %289 = dma.vmem_to_hbm [thread:$0]  %s284, 256, %s5, [#allocation4], 128, 128, 8
    $region33: #{_feed_forward_impl.1} parent=1 // pred_fallthru
      _
    // Predicated region
    $region34: #{_feed_forward_impl.1} parent=1 // pred_check
      _
    $region35: #{_feed_forward_impl.1} parent=1 // pred_check_branch
      %291 = sbr.rel (0) target = $region37
    $region36: #{_feed_forward_impl.1} parent=1 // pred_region
      %292 = dma.done [#allocation4], 256
    $region37: #{_feed_forward_impl.1} parent=1 // pred_fallthru
      _
    %293 = vsyncpa [#allocation4], 1

</llo_original>
